<compile_context>
chip_gen: v7x
topology: tpu7x:2x2x1
jax: 0.10.0
libtpu: 0.0.40
codegen_flags: <defaults>
</compile_context>

<pallas_src>
import jax
import jax.numpy as jnp
from jax.experimental import pallas as pl
from jax.experimental.pallas import tpu as pltpu

INTERP_SHAPE = (32, 32)   # small stand-in for the default (256, 256)
GRID_SIZE = 2             # small stand-in for the default 5
HID = 32                  # hidden width of the synthetic tracker


# ----------------------------------------------------------------------------- glue
def _bilinear_matrix(out_size, in_size):
    """Interpolation matrix reproducing F.interpolate(mode='bilinear', align_corners=True)."""
    denom = max(out_size - 1, 1)
    src = jnp.arange(out_size, dtype=jnp.float32) * (in_size - 1) / denom
    i0 = jnp.clip(jnp.floor(src).astype(jnp.int32), 0, in_size - 1)
    i1 = jnp.clip(i0 + 1, 0, in_size - 1)
    w1 = src - i0.astype(jnp.float32)
    w0 = 1.0 - w1
    return (w0[:, None] * jax.nn.one_hot(i0, in_size, dtype=jnp.float32)
            + w1[:, None] * jax.nn.one_hot(i1, in_size, dtype=jnp.float32))


def get_points_on_a_grid(size, extent):
    """Port of the cotracker/myotracker helper; returns (1, size*size, 2) points as (x, y)."""
    h, w = float(extent[0]), float(extent[1])
    if size == 1:
        return jnp.array([[[w / 2.0, h / 2.0]]], dtype=jnp.float32)
    margin = w / 64.0
    gy, gx = jnp.meshgrid(
        jnp.linspace(margin, h - margin, size),
        jnp.linspace(margin, w - margin, size),
        indexing="ij",
    )
    return jnp.stack([gx, gy], axis=-1).reshape(1, size * size, 2).astype(jnp.float32)


def _pick_frame_tile(T, H, W, Ntot, hid, budget_bytes=24 << 20):
    """Largest Tt dividing T whose per-step VMEM footprint fits the budget."""
    per_frame = (H * W * (2 * 2 + 4)       # double-buffered bf16 block + f32 working copy
                 + Ntot * hid * 4          # h slab
                 + 2 * 2 * 2 * Ntot * 4)   # double-buffered output block
    tt = max(1, min(T, budget_bytes // max(per_frame, 1)))
    while T % tt:
        tt -= 1
    return int(tt)


# -------------------------------------------------- fused resize+tracker+rescale kernel
def _fused_kernel(vid_ref, u_ref, m_ref, bf_ref, qemb_ref, qxy_ref, wot_ref, out_ref):
    # vid_ref : (1, Tt, H, W) bf16   frame tile of one batch
    # u_ref   : (H, W)  f32          bilinear row-interp weights (1ᵀ·rh), lane-broadcast
    # m_ref   : (W, HID) f32         rwt @ wf (column interp folded into the projection)
    # bf_ref  : (1, HID) f32
    # qemb_ref: (1, Ntot, HID) f32   per-batch query embeddings
    # qxy_ref : (1, 2, Ntot) f32     query (x, y) already rescaled to the original frame
    # wot_ref : (2, HID) f32         head weights with the final rescale folded in, transposed
    # out_ref : (1, Tt, 2, Ntot) f32 lane-dense trajectory block
    vid = vid_ref[0].astype(jnp.float32)                                  # (Tt, H, W)

    # Weighted row-reduction of every frame: VPU multiply + sublane (XLU) reduce.
    rowred = jnp.sum(vid * u_ref[...][None, :, :], axis=1)                # (Tt, W)

    # Frame embedding: one small MXU matmul, contraction over W.
    fe = jnp.maximum(
        jnp.dot(rowred, m_ref[...], preferred_element_type=jnp.float32)
        + bf_ref[...], 0.0)                                               # (Tt, HID)

    # Per-(frame, query) hidden state — no T*Ntot merge, layout stays (sublane, lane)-clean.
    h = jnp.maximum(fe[:, None, :] + qemb_ref[0][None, :, :], 0.0)        # (Tt, Ntot, HID)

    # Head: two lane reductions against the transposed (rescale-folded) head weights.
    dx = jnp.sum(h * wot_ref[0:1, :][None, :, :], axis=-1)                # (Tt, Ntot)
    dy = jnp.sum(h * wot_ref[1:2, :][None, :, :], axis=-1)                # (Tt, Ntot)

    qxy = qxy_ref[0]                                                      # (2, Ntot)
    tx = qxy[0:1, :] + dx                                                 # (Tt, Ntot)
    ty = qxy[1:2, :] + dy                                                 # (Tt, Ntot)
    out_ref[0] = jnp.concatenate([tx[:, None, :], ty[:, None, :]], axis=1)  # (Tt, 2, Ntot)


def fused_predict(video_bf16, u_bcast, m, bf, qemb, qxy_cn, wo_t, *, frame_tile):
    B, T, H, W = video_bf16.shape
    Ntot, hid = qemb.shape[1], qemb.shape[2]
    Tt = frame_tile

    flops = (2 * B * T * H * W            # weighted row reduction
             + 2 * B * T * W * hid        # rowred @ m
             + 6 * B * T * Ntot * hid)    # h construction + head reductions
    bytes_accessed = (B * T * H * W * 2                   # one bf16 video read (dominant)
                      + B * T * 2 * Ntot * 4              # trajectory write
                      + H * W * 4 + W * hid * 4
                      + B * Ntot * (hid + 2) * 4 + (2 + 1) * hid * 4)

    vmem_needed = (2 * Tt * H * W * 2 + Tt * H * W * 4    # video double-buffer + f32 copy
                   + H * W * 4 + W * hid * 4 + hid * 4
                   + Ntot * hid * 4 + 2 * Ntot * 4 + 2 * hid * 4
                   + Tt * Ntot * hid * 4                  # h slab
                   + 2 * Tt * 2 * Ntot * 4)               # output double-buffer
    vmem_limit = int(min(max(2 * vmem_needed, 32 * 1024 * 1024), 64 * 1024 * 1024))

    return pl.pallas_call(
        _fused_kernel,
        out_shape=jax.ShapeDtypeStruct((B, T, 2, Ntot), jnp.float32),
        grid=(B, T // Tt),
        in_specs=[
            pl.BlockSpec((1, Tt, H, W), lambda b, t: (b, t, 0, 0)),
            pl.BlockSpec((H, W), lambda b, t: (0, 0)),
            pl.BlockSpec((W, hid), lambda b, t: (0, 0)),
            pl.BlockSpec((1, hid), lambda b, t: (0, 0)),
            pl.BlockSpec((1, Ntot, hid), lambda b, t: (b, 0, 0)),
            pl.BlockSpec((1, 2, Ntot), lambda b, t: (b, 0, 0)),
            pl.BlockSpec((2, hid), lambda b, t: (0, 0)),
        ],
        out_specs=pl.BlockSpec((1, Tt, 2, Ntot), lambda b, t: (b, t, 0, 0)),
        compiler_params=pltpu.CompilerParams(
            dimension_semantics=("parallel", "parallel"),
            vmem_limit_bytes=vmem_limit),
        cost_estimate=pl.CostEstimate(
            flops=flops, transcendentals=0, bytes_accessed=bytes_accessed),
    )(video_bf16, u_bcast, m, bf, qemb, qxy_cn, wo_t)


# ----------------------------------------------------------------------------- forward
def evaluation_predictor_forward(video, queries, params,
                                 interp_shape=INTERP_SHAPE, grid_size=GRID_SIZE):
    B, T, H, W = video.shape
    iH, iW = interp_shape

    # Bilinear (align_corners=True) interpolation matrices.
    rh = _bilinear_matrix(iH, H)            # (iH, H)
    rwt = _bilinear_matrix(iW, W).T         # (W, iW)

    # queries[:, :, 0] *= (iW-1)/(W-1) ; queries[:, :, 1] *= (iH-1)/(H-1)   [(x, y, t) layout]
    qscale = jnp.array([(iW - 1) / (W - 1), (iH - 1) / (H - 1), 1.0], jnp.float32)
    queries = queries * qscale

    # Append support-grid points in the interp frame as (x, y, 0) — consistent (x, y, t)
    # layout so the (x, y) extraction below is valid for every point.
    if grid_size > 0:
        xy = get_points_on_a_grid(grid_size, (iH, iW))                      # (1, g*g, 2)
        xy = jnp.concatenate([xy, jnp.zeros_like(xy[:, :, :1])], axis=2)    # (x, y, 0)
        xy = jnp.broadcast_to(xy, (B,) + xy.shape[1:])
        queries = jnp.concatenate([queries, xy], axis=1)                    # (B, Ntot, 3)

    wf, bf, wq, wo = params["wf"], params["bf"], params["wq"], params["wo"]

    # Fold the resize + row-sum into constants (exact):
    #   sum_rows(rh @ frame @ rwt @ wf) == (1ᵀ·rh) @ frame @ (rwt @ wf)
    u = jnp.sum(rh, axis=0)                                                 # (H,)
    u_bcast = jnp.broadcast_to(u[:, None], (H, W)).astype(jnp.float32)      # (H, W)
    m = (rwt @ wf).astype(jnp.float32)                                      # (W, HID)

    # Tiny per-query glue (the hot, video-sized work stays in the kernel).
    qemb = jnp.einsum("bnd,dh->bnh", queries, wq).astype(jnp.float32)       # (B, Ntot, HID)

    # Fold the final rescale back to the original (H, W) frame into qxy and wo so the
    # kernel needs no constant array.  qxy is in interp coords here (pre-scaled above),
    # which is exactly why multiplying by (sx, sy) is correct.
    sx = (W - 1) / float(iW - 1)
    sy = (H - 1) / float(iH - 1)
    out_scale = jnp.array([sx, sy], jnp.float32)
    qxy_cn = jnp.transpose(queries[:, :, 0:2] * out_scale, (0, 2, 1))       # (B, 2, Ntot)
    wo_t = (wo * out_scale[None, :]).T.astype(jnp.float32)                  # (2, HID)

    # bf16 video operand for the single dominant HBM read (f32 math inside the kernel).
    video_bf16 = video.astype(jnp.bfloat16)

    Ntot, hid = qemb.shape[1], qemb.shape[2]
    Tt = _pick_frame_tile(T, H, W, Ntot, hid)
    out_cn = fused_predict(video_bf16, u_bcast, m, bf, qemb, qxy_cn, wo_t, frame_tile=Tt)
    return jnp.transpose(out_cn, (0, 1, 3, 2))                              # (B, T, Ntot, 2)


# ----------------------------------------------------------------------------- demo
if __name__ == "__main__":
    B, T, H, W = 2, 8, 16, 16
    N = 4

    key = jax.random.PRNGKey(0)
    kv, kx, ky, kf, kb, kq, ko = jax.random.split(key, 7)

    video = jax.random.normal(kv, (B, T, H, W), dtype=jnp.float32)
    qx = jax.random.uniform(kx, (B, N, 1), minval=0.0, maxval=W - 1.0)
    qy = jax.random.uniform(ky, (B, N, 1), minval=0.0, maxval=H - 1.0)
    qt = jnp.zeros((B, N, 1), jnp.float32)
    queries = jnp.concatenate([qx, qy, qt], axis=2).astype(jnp.float32)     # (x, y, t)

    params = {
        "wf": 0.02 * jax.random.normal(kf, (INTERP_SHAPE[1], HID), dtype=jnp.float32),
        "bf": 0.01 * jax.random.normal(kb, (1, HID), dtype=jnp.float32),
        "wq": 0.10 * jax.random.normal(kq, (3, HID), dtype=jnp.float32),
        "wo": 0.05 * jax.random.normal(ko, (HID, 2), dtype=jnp.float32),
    }

    fwd = jax.jit(evaluation_predictor_forward)
    traj = fwd(video, queries, params)
    jax.block_until_ready(traj)

    # Pure-JAX reference of the *unfused* module path (explicit resize -> tracker -> rescale).
    # The kernel deliberately reads the video as bf16; feed the reference the same
    # bf16-rounded video so the check isolates the kernel arithmetic.
    def reference(video, queries, params):
        B, T, H, W = video.shape
        iH, iW = INTERP_SHAPE
        rh = _bilinear_matrix(iH, H)
        rwt = _bilinear_matrix(iW, W).T
        resized = jnp.einsum("ih,bthw,wj->btij", rh, video, rwt)            # (B,T,iH,iW)
        qscale = jnp.array([(iW - 1) / (W - 1), (iH - 1) / (H - 1), 1.0], jnp.float32)
        q = queries * qscale
        xy = get_points_on_a_grid(GRID_SIZE, (iH, iW))
        xy = jnp.concatenate([xy, jnp.zeros_like(xy[:, :, :1])], axis=2)
        xy = jnp.broadcast_to(xy, (B,) + xy.shape[1:])
        q = jnp.concatenate([q, xy], axis=1)
        qemb = jnp.einsum("bnd,dh->bnh", q, params["wq"])
        fe = jnp.maximum(
            jnp.einsum("btij,jh->bth", resized, params["wf"]) + params["bf"][0], 0.0)
        h = jnp.maximum(fe[:, :, None, :] + qemb[:, None, :, :], 0.0)
        delta = jnp.einsum("btnh,hc->btnc", h, params["wo"])
        traj = q[:, None, :, 0:2] + delta
        scale = jnp.array([(W - 1) / float(iW - 1), (H - 1) / float(iH - 1)], jnp.float32)
        return traj * scale

    video_q = video.astype(jnp.bfloat16).astype(jnp.float32)
    ref = reference(video_q, queries, params)

    assert traj.shape == (B, T, N + GRID_SIZE * GRID_SIZE, 2), traj.shape
    assert jnp.all(jnp.isfinite(traj))
    err = float(jnp.max(jnp.abs(traj - ref)))
    assert err < 1e-2, err
    print("KERNEL_OK")
</pallas_src>

<mosaic_0001>
module attributes {stable_mosaic.version = 11 : i64} {
  func.func @_fused_kernel(%arg0: i32, %arg1: i32, %arg2: memref<1x8x16x16xbf16, #tpu.memory_space<vmem>>, %arg3: memref<16x16xf32, #tpu.memory_space<vmem>>, %arg4: memref<16x32xf32, #tpu.memory_space<vmem>>, %arg5: memref<1x32xf32, #tpu.memory_space<vmem>>, %arg6: memref<1x8x32xf32, #tpu.memory_space<vmem>>, %arg7: memref<1x2x8xf32, #tpu.memory_space<vmem>>, %arg8: memref<2x32xf32, #tpu.memory_space<vmem>>, %arg9: memref<1x8x2x8xf32, #tpu.memory_space<vmem>>) attributes {dimension_semantics = [#tpu.dimension_semantics<parallel>, #tpu.dimension_semantics<parallel>], iteration_bounds = array<i64: 2, 1>, scalar_prefetch = 0 : i64, scratch_operands = 0 : i64, tpu.core_type = #tpu.core_type<tc>, window_params = [{transform_indices = @transform_0, window_bounds = array<i64: 1, 8, 16, 16>}, {pipeline_mode = #tpu.pipeline_mode<synchronous>, transform_indices = @transform_1, window_bounds = array<i64: 16, 16>}, {pipeline_mode = #tpu.pipeline_mode<synchronous>, transform_indices = @transform_2, window_bounds = array<i64: 16, 32>}, {pipeline_mode = #tpu.pipeline_mode<synchronous>, transform_indices = @transform_3, window_bounds = array<i64: 1, 32>}, {transform_indices = @transform_4, window_bounds = array<i64: 1, 8, 32>}, {transform_indices = @transform_5, window_bounds = array<i64: 1, 2, 8>}, {pipeline_mode = #tpu.pipeline_mode<synchronous>, transform_indices = @transform_6, window_bounds = array<i64: 2, 32>}, {transform_indices = @transform_7, window_bounds = array<i64: 1, 8, 2, 8>}]} {
    %c0 = arith.constant 0 : index
    %c0_0 = arith.constant 0 : index
    %c0_1 = arith.constant 0 : index
    %c0_2 = arith.constant 0 : index
    %0 = vector.load %arg2[%c0, %c0_0, %c0_1, %c0_2] : memref<1x8x16x16xbf16, #tpu.memory_space<vmem>>, vector<1x8x16x16xbf16>
    %1 = vector.shape_cast %0 : vector<1x8x16x16xbf16> to vector<8x16x16xbf16>
    %2 = arith.extf %1 : vector<8x16x16xbf16> to vector<8x16x16xf32>
    %c0_3 = arith.constant 0 : index
    %c0_4 = arith.constant 0 : index
    %3 = vector.load %arg3[%c0_3, %c0_4] : memref<16x16xf32, #tpu.memory_space<vmem>>, vector<16x16xf32>
    %4 = vector.shape_cast %3 : vector<16x16xf32> to vector<1x16x16xf32>
    %5 = vector.broadcast %4 : vector<1x16x16xf32> to vector<8x16x16xf32>
    %6 = arith.mulf %2, %5 : vector<8x16x16xf32>
    %cst = arith.constant dense<0.000000e+00> : vector<8x16xf32>
    %7 = vector.multi_reduction <add>, %6, %cst [1] : vector<8x16x16xf32> to vector<8x16xf32>
    %c0_5 = arith.constant 0 : index
    %c0_6 = arith.constant 0 : index
    %8 = vector.load %arg4[%c0_5, %c0_6] : memref<16x32xf32, #tpu.memory_space<vmem>>, vector<16x32xf32>
    %cst_7 = arith.constant dense<0.000000e+00> : vector<8x32xf32>
    %9 = tpu.matmul %7, %8, %cst_7 {dimension_numbers = #tpu.dot_dimension_numbers<[1], [0], [0], [1], [0, 0, 1, 1], [], []>} : vector<8x16xf32>, vector<16x32xf32>, vector<8x32xf32> -> vector<8x32xf32>
    %c0_8 = arith.constant 0 : index
    %c0_9 = arith.constant 0 : index
    %10 = vector.load %arg5[%c0_8, %c0_9] : memref<1x32xf32, #tpu.memory_space<vmem>>, vector<1x32xf32>
    %11 = vector.broadcast %10 : vector<1x32xf32> to vector<8x32xf32>
    %12 = arith.addf %9, %11 : vector<8x32xf32>
    %cst_10 = arith.constant 0.000000e+00 : f32
    %13 = vector.broadcast %cst_10 : f32 to vector<8x32xf32>
    %14 = arith.maximumf %12, %13 : vector<8x32xf32>
    %15 = vector.shape_cast %14 : vector<8x32xf32> to vector<8x1x32xf32>
    %c0_11 = arith.constant 0 : index
    %c0_12 = arith.constant 0 : index
    %c0_13 = arith.constant 0 : index
    %16 = vector.load %arg6[%c0_11, %c0_12, %c0_13] : memref<1x8x32xf32, #tpu.memory_space<vmem>>, vector<1x8x32xf32>
    %17 = vector.shape_cast %16 : vector<1x8x32xf32> to vector<8x32xf32>
    %18 = vector.shape_cast %17 : vector<8x32xf32> to vector<1x8x32xf32>
    %19 = vector.broadcast %15 : vector<8x1x32xf32> to vector<8x8x32xf32>
    %20 = vector.broadcast %18 : vector<1x8x32xf32> to vector<8x8x32xf32>
    %21 = arith.addf %19, %20 : vector<8x8x32xf32>
    %cst_14 = arith.constant 0.000000e+00 : f32
    %22 = vector.broadcast %cst_14 : f32 to vector<8x8x32xf32>
    %23 = arith.maximumf %21, %22 : vector<8x8x32xf32>
    %c0_15 = arith.constant 0 : index
    %c0_16 = arith.constant 0 : index
    %24 = vector.load %arg8[%c0_15, %c0_16] : memref<2x32xf32, #tpu.memory_space<vmem>>, vector<1x32xf32>
    %25 = vector.shape_cast %24 : vector<1x32xf32> to vector<1x1x32xf32>
    %26 = vector.broadcast %25 : vector<1x1x32xf32> to vector<8x8x32xf32>
    %27 = arith.mulf %23, %26 : vector<8x8x32xf32>
    %cst_17 = arith.constant dense<0.000000e+00> : vector<8x8xf32>
    %28 = vector.multi_reduction <add>, %27, %cst_17 [2] : vector<8x8x32xf32> to vector<8x8xf32>
    %c1 = arith.constant 1 : index
    %c0_18 = arith.constant 0 : index
    %29 = vector.load %arg8[%c1, %c0_18] : memref<2x32xf32, #tpu.memory_space<vmem>>, vector<1x32xf32>
    %30 = vector.shape_cast %29 : vector<1x32xf32> to vector<1x1x32xf32>
    %31 = vector.broadcast %30 : vector<1x1x32xf32> to vector<8x8x32xf32>
    %32 = arith.mulf %23, %31 : vector<8x8x32xf32>
    %cst_19 = arith.constant dense<0.000000e+00> : vector<8x8xf32>
    %33 = vector.multi_reduction <add>, %32, %cst_19 [2] : vector<8x8x32xf32> to vector<8x8xf32>
    %c0_20 = arith.constant 0 : index
    %c0_21 = arith.constant 0 : index
    %c0_22 = arith.constant 0 : index
    %34 = vector.load %arg7[%c0_20, %c0_21, %c0_22] : memref<1x2x8xf32, #tpu.memory_space<vmem>>, vector<1x2x8xf32>
    %35 = vector.shape_cast %34 : vector<1x2x8xf32> to vector<2x8xf32>
    %36 = vector.extract_strided_slice %35 {offsets = [0, 0], sizes = [1, 8], strides = [1, 1]} : vector<2x8xf32> to vector<1x8xf32>
    %37 = vector.broadcast %36 : vector<1x8xf32> to vector<8x8xf32>
    %38 = arith.addf %37, %28 : vector<8x8xf32>
    %39 = vector.extract_strided_slice %35 {offsets = [1, 0], sizes = [1, 8], strides = [1, 1]} : vector<2x8xf32> to vector<1x8xf32>
    %40 = vector.broadcast %39 : vector<1x8xf32> to vector<8x8xf32>
    %41 = arith.addf %40, %33 : vector<8x8xf32>
    %42 = vector.shape_cast %38 : vector<8x8xf32> to vector<8x1x8xf32>
    %43 = vector.shape_cast %41 : vector<8x8xf32> to vector<8x1x8xf32>
    %44 = tpu.concatenate %42, %43 in 1 : vector<8x1x8xf32>, vector<8x1x8xf32> -> vector<8x2x8xf32>
    %c0_23 = arith.constant 0 : index
    %c0_24 = arith.constant 0 : index
    %c0_25 = arith.constant 0 : index
    %c0_26 = arith.constant 0 : index
    %45 = vector.load %arg9[%c0_23, %c0_24, %c0_25, %c0_26] : memref<1x8x2x8xf32, #tpu.memory_space<vmem>>, vector<1x8x2x8xf32>
    %46 = vector.shape_cast %45 : vector<1x8x2x8xf32> to vector<8x2x8xf32>
    %47 = vector.shape_cast %44 : vector<8x2x8xf32> to vector<1x8x2x8xf32>
    tpu.vector_store %arg9[%c0_23, %c0_24, %c0_25, %c0_26], %47 {strides = array<i32>} : memref<1x8x2x8xf32, #tpu.memory_space<vmem>>, vector<1x8x2x8xf32>,
    return
  }
  func.func @transform_0(%arg0: i32, %arg1: i32) -> (i32, i32, i32, i32) {
    %c0_i32 = arith.constant 0 : i32
    %c0_i32_0 = arith.constant 0 : i32
    %c0_i32_1 = arith.constant 0 : i32
    return %arg0, %arg1, %c0_i32, %c0_i32_0 : i32, i32, i32, i32
  }
  func.func @transform_1(%arg0: i32, %arg1: i32) -> (i32, i32) {
    %c0_i32 = arith.constant 0 : i32
    %c0_i32_0 = arith.constant 0 : i32
    %c0_i32_1 = arith.constant 0 : i32
    return %c0_i32, %c0_i32_0 : i32, i32
  }
  func.func @transform_2(%arg0: i32, %arg1: i32) -> (i32, i32) {
    %c0_i32 = arith.constant 0 : i32
    %c0_i32_0 = arith.constant 0 : i32
    %c0_i32_1 = arith.constant 0 : i32
    return %c0_i32, %c0_i32_0 : i32, i32
  }
  func.func @transform_3(%arg0: i32, %arg1: i32) -> (i32, i32) {
    %c0_i32 = arith.constant 0 : i32
    %c0_i32_0 = arith.constant 0 : i32
    %c0_i32_1 = arith.constant 0 : i32
    return %c0_i32, %c0_i32_0 : i32, i32
  }
  func.func @transform_4(%arg0: i32, %arg1: i32) -> (i32, i32, i32) {
    %c0_i32 = arith.constant 0 : i32
    %c0_i32_0 = arith.constant 0 : i32
    %c0_i32_1 = arith.constant 0 : i32
    return %arg0, %c0_i32, %c0_i32_0 : i32, i32, i32
  }
  func.func @transform_5(%arg0: i32, %arg1: i32) -> (i32, i32, i32) {
    %c0_i32 = arith.constant 0 : i32
    %c0_i32_0 = arith.constant 0 : i32
    %c0_i32_1 = arith.constant 0 : i32
    return %arg0, %c0_i32, %c0_i32_0 : i32, i32, i32
  }
  func.func @transform_6(%arg0: i32, %arg1: i32) -> (i32, i32) {
    %c0_i32 = arith.constant 0 : i32
    %c0_i32_0 = arith.constant 0 : i32
    %c0_i32_1 = arith.constant 0 : i32
    return %c0_i32, %c0_i32_0 : i32, i32
  }
  func.func @transform_7(%arg0: i32, %arg1: i32) -> (i32, i32, i32, i32) {
    %c0_i32 = arith.constant 0 : i32
    %c0_i32_0 = arith.constant 0 : i32
    %c0_i32_1 = arith.constant 0 : i32
    return %arg0, %arg1, %c0_i32, %c0_i32_0 : i32, i32, i32, i32
  }
}

</mosaic_0001>

<llo_original>
// kernel: evaluation_predictor_forward.1
$region0: #{evaluation_predictor_forward.1}
  #allocation0 [shape = 'u32[]', space=smem, size = 0x4, offset = 0x4, fixed_abs, tag = 'smem constant byte address 0x4 - core index']
  #allocation1 [shape = 'u32[144,128]{1,0:T(1,128)}', space=vmem, size = 0x12000, scoped, tag = 'internal scratch']
  %s0 = inlined_call_operand.vmem [shape: bf16[2,8,16,16], index: 0, kind: input, shape index: {}]
  %s1 = inlined_call_operand.vmem [shape: f32[16,16], index: 1, kind: input, shape index: {}]
  %s2 = inlined_call_operand.vmem [shape: f32[16,32], index: 2, kind: input, shape index: {}]
  %s3 = inlined_call_operand.vmem [shape: f32[1,32], index: 3, kind: input, shape index: {}]
  %s4 = inlined_call_operand.vmem [shape: f32[2,8,32], index: 4, kind: input, shape index: {}]
  %s5 = inlined_call_operand.vmem [shape: f32[2,2,8], index: 5, kind: input, shape index: {}]
  %s6 = inlined_call_operand.vmem [shape: f32[2,32], index: 6, kind: input, shape index: {}]
  %s7 = inlined_call_operand.hbm [shape: f32[2,8,2,8], index: 7, kind: output, shape index: {}]
  %s8 = sld [smem:[#allocation0]]
  $region61: #{evaluation_predictor_forward.1} parent=0
    _
  %s10 = ssub.s32 1, %s8
  %s11 = scalar_select 0, %s10, %s8
  $region1: #{evaluation_predictor_forward.1} parent=0
    #allocation2 [shape = 'u8[16384]{0}', space=vmem, size = 0x4000, scoped, tag = 'output window, operand 0']
    #allocation3 [shape = 's32[2]{0}', space=sflag, size = 0x8, scoped, tag = 'scoped memory for evaluation_predictor_forward.1']
    %12 = vsyncpa [#allocation3], 0
    %s13 = scalar_lea.sflag [#allocation3], 1
    %14 = vsyncpa %s13, 0
    loop: start=0, step=1, limit=4
    $region2: #{evaluation_predictor_forward.1} parent=1 // loop_pre_header
      _
    $region3: #{evaluation_predictor_forward.1} parent=1 // loop_header
      %s16 = sphi 0, %s20
      %p17 = scmp.ge.s32.totalorder %s16, 4
      %s23 = sphi 0, %s35
      %s24 = sphi 0, %s31
      %s25 = sphi 0, %s23
      %s26 = sphi 0, %s24
      %s27 = sphi 0, %s25
      %s28 = sphi 0, %s26
      %s40 = sphi 0, %s42
      %s43 = sphi 0, %s40
      %s44 = sphi 0, %s43
      %s60 = sphi 0, %s44
      %s64 = sphi 0, %s64
      %s66 = sphi 0, %s64
      %s67 = sphi 0, %s66
      %s81 = sphi 0, %s67
      %s85 = sphi 0, %s85
      %s87 = sphi 0, %s85
      %s88 = sphi 0, %s87
      %s102 = sphi 0, %s88
      %s106 = sphi 0, %s106
      %s108 = sphi 0, %s106
      %s109 = sphi 0, %s108
      %s123 = sphi 0, %s109
      %s129 = sphi 0, %s131
      %s132 = sphi 0, %s129
      %s133 = sphi 0, %s132
      %s149 = sphi 0, %s133
      %s155 = sphi 0, %s157
      %s158 = sphi 0, %s155
      %s159 = sphi 0, %s158
      %s175 = sphi 0, %s159
      %s179 = sphi 0, %s179
      %s181 = sphi 0, %s179
      %s182 = sphi 0, %s181
      %s196 = sphi 0, %s182
      %s204 = sphi 0, %s206
      %s207 = sphi 0, %s204
      %s208 = sphi 0, %s207
      %s224 = sphi 0, %s208
    $region4: #{evaluation_predictor_forward.1} parent=1 // loop_header_branch
      %19 = sbr.rel (%p17) target = $region8
    $region5: #{evaluation_predictor_forward.1} parent=1 // loop_body
      %s21 = ssub.s32 %s16, 1
      %s22 = ssub.s32 %s16, 2
      %s29 = sadd.s32 1, %s24
      %p30 = scmp.ge.s32.totalorder %s29, 1
      %s31 = scalar_select %p30, 0, %s29
      %s32 = sadd.s32 1, %s23
      %s33 = scalar_select %p30, %s32, %s23
      %p34 = scmp.ge.s32.totalorder %s33, 2
      %s35 = scalar_select %p34, 0, %s33
      %s36 = ssub.s32 %s23, %s35
      %s37 = ssub.s32 %s24, %s31
      %s38 = sor.u32 %s36, %s37
      %p39 = scmp.eq.s32.totalorder %s38, 0
      %s41 = sadd.s32 %s40, 1
      %s42 = scalar_select %p39, %s40, %s41
      %p45 = pneg %p39
      %p46 = scmp.eq.s32.totalorder %s16, 1
      %p47 = por %p45, %p46
      %p48 = scmp.ne.s32.totalorder %s40, %s43
      %p49 = scmp.eq.s32.totalorder %s16, 0
      %p50 = por %p48, %p49
      %p51 = scmp.ne.s32.totalorder %s40, %s43
      %p52 = scmp.eq.s32.totalorder %s21, 1
      %p53 = por %p51, %p52
      %p54 = scmp.ne.s32.totalorder %s43, %s44
      %p55 = scmp.eq.s32.totalorder %s21, 0
      %p56 = por %p54, %p55
      %p57 = scmp.ne.s32.totalorder %s43, %s44
      %p58 = scmp.eq.s32.totalorder %s22, 1
      %p59 = por %p57, %p58
      %p61 = scmp.ne.s32.totalorder %s44, %s60
      %p62 = scmp.eq.s32.totalorder %s22, 0
      %p63 = por %p61, %p62
      %s65 = sadd.s32 %s64, 1
      %p68 = scmp.eq.s32.totalorder %s16, 1
      %p69 = scmp.ne.s32.totalorder %s64, %s66
      %p70 = scmp.eq.s32.totalorder %s16, 0
      %p71 = por %p69, %p70
      %p72 = scmp.ne.s32.totalorder %s64, %s66
      %p73 = scmp.eq.s32.totalorder %s21, 1
      %p74 = por %p72, %p73
      %p75 = scmp.ne.s32.totalorder %s66, %s67
      %p76 = scmp.eq.s32.totalorder %s21, 0
      %p77 = por %p75, %p76
      %p78 = scmp.ne.s32.totalorder %s66, %s67
      %p79 = scmp.eq.s32.totalorder %s22, 1
      %p80 = por %p78, %p79
      %p82 = scmp.ne.s32.totalorder %s67, %s81
      %p83 = scmp.eq.s32.totalorder %s22, 0
      %p84 = por %p82, %p83
      %s86 = sadd.s32 %s85, 1
      %p89 = scmp.eq.s32.totalorder %s16, 1
      %p90 = scmp.ne.s32.totalorder %s85, %s87
      %p91 = scmp.eq.s32.totalorder %s16, 0
      %p92 = por %p90, %p91
      %p93 = scmp.ne.s32.totalorder %s85, %s87
      %p94 = scmp.eq.s32.totalorder %s21, 1
      %p95 = por %p93, %p94
      %p96 = scmp.ne.s32.totalorder %s87, %s88
      %p97 = scmp.eq.s32.totalorder %s21, 0
      %p98 = por %p96, %p97
      %p99 = scmp.ne.s32.totalorder %s87, %s88
      %p100 = scmp.eq.s32.totalorder %s22, 1
      %p101 = por %p99, %p100
      %p103 = scmp.ne.s32.totalorder %s88, %s102
      %p104 = scmp.eq.s32.totalorder %s22, 0
      %p105 = por %p103, %p104
      %s107 = sadd.s32 %s106, 1
      %p110 = scmp.eq.s32.totalorder %s16, 1
      %p111 = scmp.ne.s32.totalorder %s106, %s108
      %p112 = scmp.eq.s32.totalorder %s16, 0
      %p113 = por %p111, %p112
      %p114 = scmp.ne.s32.totalorder %s106, %s108
      %p115 = scmp.eq.s32.totalorder %s21, 1
      %p116 = por %p114, %p115
      %p117 = scmp.ne.s32.totalorder %s108, %s109
      %p118 = scmp.eq.s32.totalorder %s21, 0
      %p119 = por %p117, %p118
      %p120 = scmp.ne.s32.totalorder %s108, %s109
      %p121 = scmp.eq.s32.totalorder %s22, 1
      %p122 = por %p120, %p121
      %p124 = scmp.ne.s32.totalorder %s109, %s123
      %p125 = scmp.eq.s32.totalorder %s22, 0
      %p126 = por %p124, %p125
      %s127 = ssub.s32 %s23, %s35
      %p128 = scmp.eq.s32.totalorder %s127, 0
      %s130 = sadd.s32 %s129, 1
      %s131 = scalar_select %p128, %s129, %s130
      %p134 = pneg %p128
      %p135 = scmp.eq.s32.totalorder %s16, 1
      %p136 = por %p134, %p135
      %p137 = scmp.ne.s32.totalorder %s129, %s132
      %p138 = scmp.eq.s32.totalorder %s16, 0
      %p139 = por %p137, %p138
      %p140 = scmp.ne.s32.totalorder %s129, %s132
      %p141 = scmp.eq.s32.totalorder %s21, 1
      %p142 = por %p140, %p141
      %p143 = scmp.ne.s32.totalorder %s132, %s133
      %p144 = scmp.eq.s32.totalorder %s21, 0
      %p145 = por %p143, %p144
      %p146 = scmp.ne.s32.totalorder %s132, %s133
      %p147 = scmp.eq.s32.totalorder %s22, 1
      %p148 = por %p146, %p147
      %p150 = scmp.ne.s32.totalorder %s133, %s149
      %p151 = scmp.eq.s32.totalorder %s22, 0
      %p152 = por %p150, %p151
      %s153 = ssub.s32 %s23, %s35
      %p154 = scmp.eq.s32.totalorder %s153, 0
      %s156 = sadd.s32 %s155, 1
      %s157 = scalar_select %p154, %s155, %s156
      %p160 = pneg %p154
      %p161 = scmp.eq.s32.totalorder %s16, 1
      %p162 = por %p160, %p161
      %p163 = scmp.ne.s32.totalorder %s155, %s158
      %p164 = scmp.eq.s32.totalorder %s16, 0
      %p165 = por %p163, %p164
      %p166 = scmp.ne.s32.totalorder %s155, %s158
      %p167 = scmp.eq.s32.totalorder %s21, 1
      %p168 = por %p166, %p167
      %p169 = scmp.ne.s32.totalorder %s158, %s159
      %p170 = scmp.eq.s32.totalorder %s21, 0
      %p171 = por %p169, %p170
      %p172 = scmp.ne.s32.totalorder %s158, %s159
      %p173 = scmp.eq.s32.totalorder %s22, 1
      %p174 = por %p172, %p173
      %p176 = scmp.ne.s32.totalorder %s159, %s175
      %p177 = scmp.eq.s32.totalorder %s22, 0
      %p178 = por %p176, %p177
      %s180 = sadd.s32 %s179, 1
      %p183 = scmp.eq.s32.totalorder %s16, 1
      %p184 = scmp.ne.s32.totalorder %s179, %s181
      %p185 = scmp.eq.s32.totalorder %s16, 0
      %p186 = por %p184, %p185
      %p187 = scmp.ne.s32.totalorder %s179, %s181
      %p188 = scmp.eq.s32.totalorder %s21, 1
      %p189 = por %p187, %p188
      %p190 = scmp.ne.s32.totalorder %s181, %s182
      %p191 = scmp.eq.s32.totalorder %s21, 0
      %p192 = por %p190, %p191
      %p193 = scmp.ne.s32.totalorder %s181, %s182
      %p194 = scmp.eq.s32.totalorder %s22, 1
      %p195 = por %p193, %p194
      %p197 = scmp.ne.s32.totalorder %s182, %s196
      %p198 = scmp.eq.s32.totalorder %s22, 0
      %p199 = por %p197, %p198
      %s200 = ssub.s32 %s23, %s35
      %s201 = ssub.s32 %s24, %s31
      %s202 = sor.u32 %s200, %s201
      %p203 = scmp.eq.s32.totalorder %s202, 0
      %s205 = sadd.s32 %s204, 1
      %s206 = scalar_select %p203, %s204, %s205
      %p209 = pneg %p203
      %p210 = scmp.eq.s32.totalorder %s16, 1
      %p211 = por %p209, %p210
      %p212 = scmp.ne.s32.totalorder %s204, %s207
      %p213 = scmp.eq.s32.totalorder %s16, 0
      %p214 = por %p212, %p213
      %p215 = scmp.ne.s32.totalorder %s204, %s207
      %p216 = scmp.eq.s32.totalorder %s21, 1
      %p217 = por %p215, %p216
      %p218 = scmp.ne.s32.totalorder %s207, %s208
      %p219 = scmp.eq.s32.totalorder %s21, 0
      %p220 = por %p218, %p219
      %p221 = scmp.ne.s32.totalorder %s207, %s208
      %p222 = scmp.eq.s32.totalorder %s22, 1
      %p223 = por %p221, %p222
      %p225 = scmp.ne.s32.totalorder %s208, %s224
      %p226 = scmp.eq.s32.totalorder %s22, 0
      %p227 = por %p225, %p226
      %p228 = scmp.le.s32.totalorder 1, %s16
      %p229 = scmp.lt.s32.totalorder %s16, 3
      %p230 = pnand %p228, %p229
      %p231 = pneg %p230
      // Predicated region
      $region9: #{evaluation_predictor_forward.1} parent=5 // pred_check
        _
      $region10: #{evaluation_predictor_forward.1} parent=5 // pred_check_branch
        %233 = sbr.rel (%p230) target = $region12
      $region11: #{evaluation_predictor_forward.1} parent=5 // pred_region
        %s234 = ssub.s32 %s16, 1
        // Predicated region
        $region13: #{evaluation_predictor_forward.1} parent=11 // pred_check
          %p235 = pneg %p77
        $region14: #{evaluation_predictor_forward.1} parent=11 // pred_check_branch
          %237 = sbr.rel (%p235) target = $region16
        $region15: #{evaluation_predictor_forward.1} parent=11 // pred_region
          _
        $region16: #{evaluation_predictor_forward.1} parent=11 // pred_fallthru
          _
        // Predicated region
        $region17: #{evaluation_predictor_forward.1} parent=11 // pred_check
          %p238 = pneg %p98
        $region18: #{evaluation_predictor_forward.1} parent=11 // pred_check_branch
          %240 = sbr.rel (%p238) target = $region20
        $region19: #{evaluation_predictor_forward.1} parent=11 // pred_region
          _
        $region20: #{evaluation_predictor_forward.1} parent=11 // pred_fallthru
          _
        // Predicated region
        $region21: #{evaluation_predictor_forward.1} parent=11 // pred_check
          %p241 = pneg %p119
        $region22: #{evaluation_predictor_forward.1} parent=11 // pred_check_branch
          %243 = sbr.rel (%p241) target = $region24
        $region23: #{evaluation_predictor_forward.1} parent=11 // pred_region
          _
        $region24: #{evaluation_predictor_forward.1} parent=11 // pred_fallthru
          _
        // Predicated region
        $region25: #{evaluation_predictor_forward.1} parent=11 // pred_check
          %p244 = pneg %p192
        $region26: #{evaluation_predictor_forward.1} parent=11 // pred_check_branch
          %246 = sbr.rel (%p244) target = $region28
        $region27: #{evaluation_predictor_forward.1} parent=11 // pred_region
          _
        $region28: #{evaluation_predictor_forward.1} parent=11 // pred_fallthru
          _
      $region12: #{evaluation_predictor_forward.1} parent=5 // pred_fallthru
        _
      %p247 = scmp.lt.s32.totalorder %s16, 2
      // Predicated region
      $region29: #{evaluation_predictor_forward.1} parent=5 // pred_check
        %p248 = pneg %p247
      $region30: #{evaluation_predictor_forward.1} parent=5 // pred_check_branch
        %250 = sbr.rel (%p248) target = $region32
      $region31: #{evaluation_predictor_forward.1} parent=5 // pred_region
        // Predicated region
        $region33: #{evaluation_predictor_forward.1} parent=31 // pred_check
          %p251 = pneg %p50
        $region34: #{evaluation_predictor_forward.1} parent=31 // pred_check_branch
          %253 = sbr.rel (%p251) target = $region36
        $region35: #{evaluation_predictor_forward.1} parent=31 // pred_region
          %s254 = smul.u32 8, %s24
          %p255 = scmp.lt.s32.totalorder %s23, 1
          %s256 = scalar_select %p255, %s23, 1
          %p257 = scmp.lt.s32.totalorder %s254, 7
          %s258 = scalar_select %p257, %s254, 7
          %s259 = smul.addr %s258, 2
          %s260 = smul.addr %s256, 16
          %s261 = sadd.s32 %s259, %s260
          %s262 = smul.addr %s261, 4
          %s263 = scalar_lea.vmem %s0, %s262
          %s264 = smul.u32 8, %s24
        $region36: #{evaluation_predictor_forward.1} parent=31 // pred_fallthru
          _
        // Predicated region
        $region37: #{evaluation_predictor_forward.1} parent=31 // pred_check
          %p265 = pneg %p139
        $region38: #{evaluation_predictor_forward.1} parent=31 // pred_check_branch
          %267 = sbr.rel (%p265) target = $region40
        $region39: #{evaluation_predictor_forward.1} parent=31 // pred_region
          %p268 = scmp.lt.s32.totalorder %s23, 1
          %s269 = scalar_select %p268, %s23, 1
          %s270 = smul.addr %s269, 8
          %s271 = scalar_lea.vmem %s4, %s270
        $region40: #{evaluation_predictor_forward.1} parent=31 // pred_fallthru
          _
        // Predicated region
        $region41: #{evaluation_predictor_forward.1} parent=31 // pred_check
          %p272 = pneg %p165
        $region42: #{evaluation_predictor_forward.1} parent=31 // pred_check_branch
          %274 = sbr.rel (%p272) target = $region44
        $region43: #{evaluation_predictor_forward.1} parent=31 // pred_region
          %p275 = scmp.lt.s32.totalorder %s23, 1
          %s276 = scalar_select %p275, %s23, 1
          %s277 = smul.addr %s276, 2
          %s278 = scalar_lea.vmem %s5, %s277
        $region44: #{evaluation_predictor_forward.1} parent=31 // pred_fallthru
          _
      $region32: #{evaluation_predictor_forward.1} parent=5 // pred_fallthru
        _
      %p279 = scmp.le.s32.totalorder 1, %s16
      %p280 = scmp.lt.s32.totalorder %s16, 3
      %p281 = pnand %p279, %p280
      %p282 = pneg %p281
      // Predicated region
      $region45: #{evaluation_predictor_forward.1} parent=5 // pred_check
        _
      $region46: #{evaluation_predictor_forward.1} parent=5 // pred_check_branch
        %284 = sbr.rel (%p281) target = $region48
      $region47: #{evaluation_predictor_forward.1} parent=5 // pred_region
        %s285 = ssub.s32 %s16, 1
        %s286 = smul.u32 8, %s26
        %p287 = scmp.lt.s32.totalorder %s25, 1
        %s288 = scalar_select %p287, %s25, 1
        %p289 = scmp.lt.s32.totalorder %s286, 7
        %s290 = scalar_select %p289, %s286, 7
        %s291 = smul.addr %s290, 2
        %s292 = smul.addr %s288, 16
        %s293 = sadd.s32 %s291, %s292
        %s294 = smul.addr %s293, 4
        %s295 = scalar_lea.vmem %s0, %s294
        %p296 = pneg %p56
        %p297 = pneg %p53
        %p298 = pneg %p77
        %p299 = pneg %p74
        %p300 = pneg %p98
        %p301 = pneg %p95
        %p302 = pneg %p119
        %p303 = pneg %p116
        %p304 = scmp.lt.s32.totalorder %s25, 1
        %s305 = scalar_select %p304, %s25, 1
        %s306 = smul.addr %s305, 8
        %s307 = scalar_lea.vmem %s4, %s306
        %p308 = pneg %p145
        %p309 = pneg %p142
        %p310 = scmp.lt.s32.totalorder %s25, 1
        %s311 = scalar_select %p310, %s25, 1
        %s312 = smul.addr %s311, 2
        %s313 = scalar_lea.vmem %s5, %s312
        %p314 = pneg %p171
        %p315 = pneg %p168
        %p316 = pneg %p192
        %p317 = pneg %p189
        %p318 = pneg %p220
        %p319 = pneg %p217
        %s320 = sand.u32 %s207, 1
        %s321 = scalar_lea.sflag [#allocation3], %s320
        %s322 = sand.u32 %s207, 1
        %s323 = smul.addr %s322, 16
        %s324 = scalar_lea.vmem [#allocation2], %s323
        %s325 = smul.u32 8, %s26
        %p326 = scmp.lt.s32.totalorder %s25, 1
        %s327 = scalar_select %p326, %s25, 1
        %p328 = scmp.lt.s32.totalorder %s325, 7
        %s329 = scalar_select %p328, %s325, 7
        %s330 = smul.addr %s329, 2
        %s331 = smul.addr %s327, 16
        %s332 = sadd.s32 %s330, %s331
        %s333 = smul.addr %s332, 4
        %s334 = scalar_lea.vmem %s0, %s333
        %s335 = smul.u32 8, %s26
        %p336 = scmp.lt.s32.totalorder %s25, 1
        %s337 = scalar_select %p336, %s25, 1
        %s338 = smul.addr %s337, 8
        %s339 = scalar_lea.vmem %s4, %s338
        %p340 = scmp.lt.s32.totalorder %s25, 1
        %s341 = scalar_select %p340, %s25, 1
        %s342 = smul.addr %s341, 2
        %s343 = scalar_lea.vmem %s5, %s342
        %s344 = smul.u32 8, %s26
        %v345 = vld [vmem:[%s334] sm:$0xf]
        %v346 = vld [vmem:[%s334 + $0x4] sm:$0xf]
        %v347 = vld [vmem:[%s334 + $0x8] sm:$0xf]
        %v348 = vld [vmem:[%s334 + $0xc] sm:$0xf]
        %v349 = vld [vmem:[%s334 + $0x10] sm:$0xf]
        %v350 = vld [vmem:[%s334 + $0x14] sm:$0xf]
        %v351 = vld [vmem:[%s334 + $0x18] sm:$0xf]
        %v352 = vld [vmem:[%s334 + $0x1c] sm:$0xf]
        %v353 = vld [vmem:[%s334 + $0x20] sm:$0xf]
        %v354 = vld [vmem:[%s334 + $0x24] sm:$0xf]
        %v355 = vld [vmem:[%s334 + $0x28] sm:$0xf]
        %v356 = vld [vmem:[%s334 + $0x2c] sm:$0xf]
        %v357 = vld [vmem:[%s334 + $0x30] sm:$0xf]
        %v358 = vld [vmem:[%s334 + $0x34] sm:$0xf]
        %v359 = vld [vmem:[%s334 + $0x38] sm:$0xf]
        %v360 = vld [vmem:[%s334 + $0x3c] sm:$0xf]
        %v361 = vunpack.c.l.bf16 %v345
        %v362 = vunpack.c.l.bf16 %v346
        %v363 = vunpack.c.l.bf16 %v347
        %v364 = vunpack.c.l.bf16 %v348
        %v365 = vunpack.c.l.bf16 %v349
        %v366 = vunpack.c.l.bf16 %v350
        %v367 = vunpack.c.l.bf16 %v351
        %v368 = vunpack.c.l.bf16 %v352
        %v369 = vunpack.c.l.bf16 %v353
        %v370 = vunpack.c.l.bf16 %v354
        %v371 = vunpack.c.l.bf16 %v355
        %v372 = vunpack.c.l.bf16 %v356
        %v373 = vunpack.c.l.bf16 %v357
        %v374 = vunpack.c.l.bf16 %v358
        %v375 = vunpack.c.l.bf16 %v359
        %v376 = vunpack.c.l.bf16 %v360
        %v377 = vld [vmem:[%s1] sm:$0xff]
        %v378 = vld [vmem:[%s1 + $0x8] sm:$0xff]
        %v379 = vmul.f32 %v361, %v377
        %v380 = vmul.f32 %v362, %v378
        %v381 = vmul.f32 %v363, %v377
        %v382 = vmul.f32 %v364, %v378
        %v383 = vmul.f32 %v365, %v377
        %v384 = vmul.f32 %v366, %v378
        %v385 = vmul.f32 %v367, %v377
        %v386 = vmul.f32 %v368, %v378
        %v387 = vmul.f32 %v369, %v377
        %v388 = vmul.f32 %v370, %v378
        %v389 = vmul.f32 %v371, %v377
        %v390 = vmul.f32 %v372, %v378
        %v391 = vmul.f32 %v373, %v377
        %v392 = vmul.f32 %v374, %v378
        %v393 = vmul.f32 %v375, %v377
        %v394 = vmul.f32 %v376, %v378
        %vm395 = vcmask 130048
        %v396 = vsel %vm395, %v379, 0.0
        %v397 = vsel %vm395, %v380, 0.0
        %v398 = vadd.f32 %v396, %v397
        %v399 = vrot.slane %v398, 4
        %v400 = vadd.f32 %v398, %v399
        %v401 = vrot.slane %v400, 2
        %v402 = vadd.f32 %v400, %v401
        %v403 = vrot.slane %v402, 1
        %v404 = vadd.f32 %v402, %v403
        %v405 = vsel %vm395, %v381, 0.0
        %v406 = vsel %vm395, %v382, 0.0
        %v407 = vadd.f32 %v405, %v406
        %v408 = vrot.slane %v407, 4
        %v409 = vadd.f32 %v407, %v408
        %v410 = vrot.slane %v409, 2
        %v411 = vadd.f32 %v409, %v410
        %v412 = vrot.slane %v411, 1
        %v413 = vadd.f32 %v411, %v412
        %v414 = vsel %vm395, %v383, 0.0
        %v415 = vsel %vm395, %v384, 0.0
        %v416 = vadd.f32 %v414, %v415
        %v417 = vrot.slane %v416, 4
        %v418 = vadd.f32 %v416, %v417
        %v419 = vrot.slane %v418, 2
        %v420 = vadd.f32 %v418, %v419
        %v421 = vrot.slane %v420, 1
        %v422 = vadd.f32 %v420, %v421
        %v423 = vsel %vm395, %v385, 0.0
        %v424 = vsel %vm395, %v386, 0.0
        %v425 = vadd.f32 %v423, %v424
        %v426 = vrot.slane %v425, 4
        %v427 = vadd.f32 %v425, %v426
        %v428 = vrot.slane %v427, 2
        %v429 = vadd.f32 %v427, %v428
        %v430 = vrot.slane %v429, 1
        %v431 = vadd.f32 %v429, %v430
        %v432 = vsel %vm395, %v387, 0.0
        %v433 = vsel %vm395, %v388, 0.0
        %v434 = vadd.f32 %v432, %v433
        %v435 = vrot.slane %v434, 4
        %v436 = vadd.f32 %v434, %v435
        %v437 = vrot.slane %v436, 2
        %v438 = vadd.f32 %v436, %v437
        %v439 = vrot.slane %v438, 1
        %v440 = vadd.f32 %v438, %v439
        %v441 = vsel %vm395, %v389, 0.0
        %v442 = vsel %vm395, %v390, 0.0
        %v443 = vadd.f32 %v441, %v442
        %v444 = vrot.slane %v443, 4
        %v445 = vadd.f32 %v443, %v444
        %v446 = vrot.slane %v445, 2
        %v447 = vadd.f32 %v445, %v446
        %v448 = vrot.slane %v447, 1
        %v449 = vadd.f32 %v447, %v448
        %v450 = vsel %vm395, %v391, 0.0
        %v451 = vsel %vm395, %v392, 0.0
        %v452 = vadd.f32 %v450, %v451
        %v453 = vrot.slane %v452, 4
        %v454 = vadd.f32 %v452, %v453
        %v455 = vrot.slane %v454, 2
        %v456 = vadd.f32 %v454, %v455
        %v457 = vrot.slane %v456, 1
        %v458 = vadd.f32 %v456, %v457
        %v459 = vsel %vm395, %v393, 0.0
        %v460 = vsel %vm395, %v394, 0.0
        %v461 = vadd.f32 %v459, %v460
        %v462 = vrot.slane %v461, 4
        %v463 = vadd.f32 %v461, %v462
        %v464 = vrot.slane %v463, 2
        %v465 = vadd.f32 %v463, %v464
        %v466 = vrot.slane %v465, 1
        %v467 = vadd.f32 %v465, %v466
        %v468 = vld [vmem:[%s2] sm:$0xff]
        %v469 = vld [vmem:[%s2 + $0x8] sm:$0xff]
        %v470 = vld [vmem:[%s3] sm:$0x1]
        %v472 = vlaneseq
        %v473 = vshrl.u32 %v472, 7
        %v474 = vsub.s32 0, %v473
        %v475 = vrot.slane %v470, %v474
        %vm485 = vcmask 1041409
        %v486 = vsel %vm485, %v413, %v404
        %vm487 = vcmask 1042434
        %v488 = vsel %vm487, %v422, %v486
        %vm489 = vcmask 1043459
        %v490 = vsel %vm489, %v431, %v488
        %vm491 = vcmask 1044484
        %v492 = vsel %vm491, %v440, %v490
        %vm493 = vcmask 1045509
        %v494 = vsel %vm493, %v449, %v492
        %vm495 = vcmask 1046534
        %v496 = vsel %vm495, %v458, %v494
        %vm497 = vcmask 1047559
        %v498 = vsel %vm497, %v467, %v496
        %v499 = vsel %vm395, %v498, 0
        %501 = vmatprep.subr.mxu0 0.0
        %502 = vmatpush1.msra.mxu0 %v468
        %503 = vmatprep.subr.mxu0 0.0
        %504 = vmatpush1.msra.mxu0 %v469
        %505 = vmatprep.subr.mxu0 0.0
        %506 = vmatpush1.msra.mxu0 0.0
        %507 = vmatprep.subr.mxu0 0.0
        %508 = vmatpush1.msra.mxu0 0.0
        %509 = vmatprep.subr.mxu0 0.0
        %510 = vmatpush1.msra.mxu0 0.0
        %511 = vmatprep.subr.mxu0 0.0
        %512 = vmatpush1.msra.mxu0 0.0
        %513 = vmatprep.subr.mxu0 0.0
        %514 = vmatpush1.msra.mxu0 0.0
        %515 = vmatprep.subr.mxu0 0.0
        %516 = vmatpush1.msra.mxu0 0.0
        %517 = vmatprep.subr.mxu0 0.0
        %518 = vmatpush1.msra.mxu0 0.0
        %519 = vmatprep.subr.mxu0 0.0
        %520 = vmatpush1.msra.mxu0 0.0
        %521 = vmatprep.subr.mxu0 0.0
        %522 = vmatpush1.msra.mxu0 0.0
        %523 = vmatprep.subr.mxu0 0.0
        %524 = vmatpush1.msra.mxu0 0.0
        %525 = vmatprep.subr.mxu0 0.0
        %526 = vmatpush1.msra.mxu0 0.0
        %527 = vmatprep.subr.mxu0 0.0
        %528 = vmatpush1.msra.mxu0 0.0
        %529 = vmatprep.subr.mxu0 0.0
        %530 = vmatpush1.msra.mxu0 0.0
        %531 = vmatprep.subr.mxu0 0.0
        %532 = vmatpush1.msra.mxu0 0.0
        %533 = vmatprep.subr.mxu0 0.0
        %534 = vmatpush1.msra.mxu0 0.0
        %535 = vmatprep.subr.mxu0 0.0
        %536 = vmatpush1.msra.mxu0 0.0
        %537 = vmatprep.subr.mxu0 0.0
        %538 = vmatpush1.msra.mxu0 0.0
        %539 = vmatprep.subr.mxu0 0.0
        %540 = vmatpush1.msra.mxu0 0.0
        %541 = vmatprep.subr.mxu0 0.0
        %542 = vmatpush1.msra.mxu0 0.0
        %543 = vmatprep.subr.mxu0 0.0
        %544 = vmatpush1.msra.mxu0 0.0
        %545 = vmatprep.subr.mxu0 0.0
        %546 = vmatpush1.msra.mxu0 0.0
        %547 = vmatprep.subr.mxu0 0.0
        %548 = vmatpush1.msra.mxu0 0.0
        %549 = vmatprep.subr.mxu0 0.0
        %550 = vmatpush1.msra.mxu0 0.0
        %551 = vmatprep.subr.mxu0 0.0
        %552 = vmatpush1.msra.mxu0 0.0
        %553 = vmatprep.subr.mxu0 0.0
        %554 = vmatpush1.msra.mxu0 0.0
        %555 = vmatprep.subr.mxu0 0.0
        %556 = vmatpush1.msra.mxu0 0.0
        %557 = vmatprep.subr.mxu0 0.0
        %558 = vmatpush1.msra.mxu0 0.0
        %559 = vmatprep.subr.mxu0 0.0
        %560 = vmatpush1.msra.mxu0 0.0
        %561 = vmatprep.subr.mxu0 0.0
        %562 = vmatpush1.msra.mxu0 0.0
        %563 = vmatprep.subr.mxu0 0.0
        %564 = vmatpush1.msra.mxu0 0.0
        %565 = vmatprep.mubr.f32.mxu0 0.0
        %566 = vmatmul.mubr.f32.gmra.mrb[0].mxu0 %v499
        %v567 = vpop.f32.mrb[0].mxu0
        %v568 = vadd.f32 %v475, %v567
        %v569 = vpop.f32.mrb[0].mxu0
        %570 = vdwg.mxu0
        %v571 = vmax.f32 %v568, 0.0
        %v573 = vcombine.high %v571, %v571
        %v575 = vunpack.c.l.s4 1966171168
        %v576 = vunpack.c.0.s8 %v575
        %v577 = vlaneseq
        %v578 = vshrl.u32 %v577, 7
        %v579 = vsub.s32 %v576, %v578
        %v580 = vrot.slane %v571, %v579
        %v582 = vunpack.c.l.s4 1966171168
        %v583 = vunpack.c.0.s8 %v582
        %v584 = vlaneseq
        %v585 = vshrl.u32 %v584, 7
        %v586 = vsub.s32 %v583, %v585
        %v587 = vrot.slane %v573, %v586
        %v588 = vcombine.high %v580, %v580
        %v589 = vcombine.high %v587, %v587
        %v591 = vunpack.c.l.s4 1966171168
        %v592 = vunpack.c.0.s8 %v591
        %v593 = vlaneseq
        %v594 = vshrl.u32 %v593, 7
        %v595 = vsub.s32 %v592, %v594
        %v596 = vrot.slane %v580, %v595
        %v598 = vunpack.c.l.s4 1966171168
        %v599 = vunpack.c.0.s8 %v598
        %v600 = vlaneseq
        %v601 = vshrl.u32 %v600, 7
        %v602 = vsub.s32 %v599, %v601
        %v603 = vrot.slane %v587, %v602
        %v605 = vunpack.c.l.s4 1966171168
        %v606 = vunpack.c.0.s8 %v605
        %v607 = vlaneseq
        %v608 = vshrl.u32 %v607, 7
        %v609 = vsub.s32 %v606, %v608
        %v610 = vrot.slane %v588, %v609
        %v612 = vunpack.c.l.s4 1966171168
        %v613 = vunpack.c.0.s8 %v612
        %v614 = vlaneseq
        %v615 = vshrl.u32 %v614, 7
        %v616 = vsub.s32 %v613, %v615
        %v617 = vrot.slane %v589, %v616
        %v618 = vcombine.high %v596, %v596
        %v619 = vcombine.high %v603, %v603
        %v620 = vcombine.high %v610, %v610
        %v621 = vcombine.high %v617, %v617
        %v622 = vld [vmem:[%s339] sm:$0xff]
        %v623 = vlaneseq
        %v624 = vshrl.u32 %v623, 7
        %v625 = vsub.s32 0, %v624
        %v626 = vrot.slane %v596, %v625
        %v627 = vlaneseq
        %v628 = vshrl.u32 %v627, 7
        %v629 = vsub.s32 0, %v628
        %v630 = vrot.slane %v610, %v629
        %v631 = vlaneseq
        %v632 = vshrl.u32 %v631, 7
        %v633 = vsub.s32 0, %v632
        %v634 = vrot.slane %v618, %v633
        %v635 = vlaneseq
        %v636 = vshrl.u32 %v635, 7
        %v637 = vsub.s32 0, %v636
        %v638 = vrot.slane %v620, %v637
        %v639 = vlaneseq
        %v640 = vshrl.u32 %v639, 7
        %v641 = vsub.s32 0, %v640
        %v642 = vrot.slane %v603, %v641
        %v643 = vlaneseq
        %v644 = vshrl.u32 %v643, 7
        %v645 = vsub.s32 0, %v644
        %v646 = vrot.slane %v617, %v645
        %v647 = vlaneseq
        %v648 = vshrl.u32 %v647, 7
        %v649 = vsub.s32 0, %v648
        %v650 = vrot.slane %v619, %v649
        %v651 = vlaneseq
        %v652 = vshrl.u32 %v651, 7
        %v653 = vsub.s32 0, %v652
        %v654 = vrot.slane %v621, %v653
        %v663 = vadd.f32 %v626, %v622
        %v664 = vadd.f32 %v630, %v622
        %v665 = vadd.f32 %v634, %v622
        %v666 = vadd.f32 %v638, %v622
        %v667 = vadd.f32 %v642, %v622
        %v668 = vadd.f32 %v646, %v622
        %v669 = vadd.f32 %v650, %v622
        %v670 = vadd.f32 %v654, %v622
        %v671 = vmax.f32 %v663, 0.0
        %v672 = vmax.f32 %v664, 0.0
        %v673 = vmax.f32 %v665, 0.0
        %v674 = vmax.f32 %v666, 0.0
        %v675 = vmax.f32 %v667, 0.0
        %v676 = vmax.f32 %v668, 0.0
        %v677 = vmax.f32 %v669, 0.0
        %v678 = vmax.f32 %v670, 0.0
        %v679 = vld [vmem:[%s6] sm:$0x1]
        %v680 = vlaneseq
        %v681 = vshrl.u32 %v680, 7
        %v682 = vsub.s32 0, %v681
        %v683 = vrot.slane %v679, %v682
        %v684 = vmul.f32 %v671, %v683
        %v685 = vmul.f32 %v672, %v683
        %v686 = vmul.f32 %v673, %v683
        %v687 = vmul.f32 %v674, %v683
        %v688 = vmul.f32 %v675, %v683
        %v689 = vmul.f32 %v676, %v683
        %v690 = vmul.f32 %v677, %v683
        %v691 = vmul.f32 %v678, %v683
        %vm692 = vcmask 261120
        %v693 = vsel %vm692, %v684, 0.0
        %694 = vadd.xlane.f32.xlu0 %v693
        %v695 = vpop.xlane.xlu0 %694
        %v696 = vsel %vm692, %v685, 0.0
        %697 = vadd.xlane.f32.xlu0 %v696
        %v698 = vpop.xlane.xlu0 %697
        %v699 = vsel %vm692, %v686, 0.0
        %700 = vadd.xlane.f32.xlu0 %v699
        %v701 = vpop.xlane.xlu0 %700
        %v702 = vsel %vm692, %v687, 0.0
        %703 = vadd.xlane.f32.xlu0 %v702
        %v704 = vpop.xlane.xlu0 %703
        %v705 = vsel %vm692, %v688, 0.0
        %706 = vadd.xlane.f32.xlu0 %v705
        %v707 = vpop.xlane.xlu0 %706
        %v708 = vsel %vm692, %v689, 0.0
        %709 = vadd.xlane.f32.xlu0 %v708
        %v710 = vpop.xlane.xlu0 %709
        %v711 = vsel %vm692, %v690, 0.0
        %712 = vadd.xlane.f32.xlu0 %v711
        %v713 = vpop.xlane.xlu0 %712
        %v714 = vsel %vm692, %v691, 0.0
        %715 = vadd.xlane.f32.xlu0 %v714
        %v716 = vpop.xlane.xlu0 %715
        %v717 = vld [vmem:[%s6 + $0x1] sm:$0x1]
        %v718 = vlaneseq
        %v719 = vshrl.u32 %v718, 7
        %v720 = vsub.s32 0, %v719
        %v721 = vrot.slane %v717, %v720
        %v722 = vmul.f32 %v671, %v721
        %v723 = vmul.f32 %v672, %v721
        %v724 = vmul.f32 %v673, %v721
        %v725 = vmul.f32 %v674, %v721
        %v726 = vmul.f32 %v675, %v721
        %v727 = vmul.f32 %v676, %v721
        %v728 = vmul.f32 %v677, %v721
        %v729 = vmul.f32 %v678, %v721
        %v730 = vsel %vm692, %v722, 0.0
        %731 = vadd.xlane.f32.xlu0 %v730
        %v732 = vpop.xlane.xlu0 %731
        %v733 = vsel %vm692, %v723, 0.0
        %734 = vadd.xlane.f32.xlu0 %v733
        %v735 = vpop.xlane.xlu0 %734
        %v736 = vsel %vm692, %v724, 0.0
        %737 = vadd.xlane.f32.xlu0 %v736
        %v738 = vpop.xlane.xlu0 %737
        %v739 = vsel %vm692, %v725, 0.0
        %740 = vadd.xlane.f32.xlu0 %v739
        %v741 = vpop.xlane.xlu0 %740
        %v742 = vsel %vm692, %v726, 0.0
        %743 = vadd.xlane.f32.xlu0 %v742
        %v744 = vpop.xlane.xlu0 %743
        %v745 = vsel %vm692, %v727, 0.0
        %746 = vadd.xlane.f32.xlu0 %v745
        %v747 = vpop.xlane.xlu0 %746
        %v748 = vsel %vm692, %v728, 0.0
        %749 = vadd.xlane.f32.xlu0 %v748
        %v750 = vpop.xlane.xlu0 %749
        %v751 = vsel %vm692, %v729, 0.0
        %752 = vadd.xlane.f32.xlu0 %v751
        %v753 = vpop.xlane.xlu0 %752
        %v754 = vld [vmem:[%s343] sm:$0x3]
        %v755 = vlaneseq
        %v756 = vshrl.u32 %v755, 7
        %v757 = vsub.s32 0, %v756
        %v758 = vrot.slane %v754, %v757
        %v767 = vlaneseq
        %v768 = vand.u32 %v767, 127
        %v769 = vlaneseq
        %v770 = vshrl.u32 %v769, 7
        %v771 = vsub.s32 %v768, %v770
        %v772 = vrot.slane %v695, %v771
        %v773 = vlaneseq
        %v774 = vshrl.u32 %v773, 7
        %v775 = vsub.s32 %v768, %v774
        %v776 = vrot.slane %v698, %v775
        %v777 = vlaneseq
        %v778 = vshrl.u32 %v777, 7
        %v779 = vsub.s32 %v768, %v778
        %v780 = vrot.slane %v701, %v779
        %v781 = vlaneseq
        %v782 = vshrl.u32 %v781, 7
        %v783 = vsub.s32 %v768, %v782
        %v784 = vrot.slane %v704, %v783
        %v785 = vlaneseq
        %v786 = vshrl.u32 %v785, 7
        %v787 = vsub.s32 %v768, %v786
        %v788 = vrot.slane %v707, %v787
        %v789 = vlaneseq
        %v790 = vshrl.u32 %v789, 7
        %v791 = vsub.s32 %v768, %v790
        %v792 = vrot.slane %v710, %v791
        %v793 = vlaneseq
        %v794 = vshrl.u32 %v793, 7
        %v795 = vsub.s32 %v768, %v794
        %v796 = vrot.slane %v713, %v795
        %v797 = vlaneseq
        %v798 = vshrl.u32 %v797, 7
        %v799 = vsub.s32 %v768, %v798
        %v800 = vrot.slane %v716, %v799
        %v801 = vsel %vm485, %v776, %v772
        %v802 = vsel %vm487, %v780, %v801
        %v803 = vsel %vm489, %v784, %v802
        %v804 = vsel %vm491, %v788, %v803
        %v805 = vsel %vm493, %v792, %v804
        %v806 = vsel %vm495, %v796, %v805
        %v807 = vsel %vm497, %v800, %v806
        %v809 = vadd.f32 %v758, %v807
        %v810 = vlaneseq
        %v811 = vshrl.u32 %v810, 7
        %v812 = vsub.s32 1, %v811
        %v813 = vrot.slane %v754, %v812
        %v822 = vlaneseq
        %v823 = vshrl.u32 %v822, 7
        %v824 = vsub.s32 %v768, %v823
        %v825 = vrot.slane %v732, %v824
        %v826 = vlaneseq
        %v827 = vshrl.u32 %v826, 7
        %v828 = vsub.s32 %v768, %v827
        %v829 = vrot.slane %v735, %v828
        %v830 = vlaneseq
        %v831 = vshrl.u32 %v830, 7
        %v832 = vsub.s32 %v768, %v831
        %v833 = vrot.slane %v738, %v832
        %v834 = vlaneseq
        %v835 = vshrl.u32 %v834, 7
        %v836 = vsub.s32 %v768, %v835
        %v837 = vrot.slane %v741, %v836
        %v838 = vlaneseq
        %v839 = vshrl.u32 %v838, 7
        %v840 = vsub.s32 %v768, %v839
        %v841 = vrot.slane %v744, %v840
        %v842 = vlaneseq
        %v843 = vshrl.u32 %v842, 7
        %v844 = vsub.s32 %v768, %v843
        %v845 = vrot.slane %v747, %v844
        %v846 = vlaneseq
        %v847 = vshrl.u32 %v846, 7
        %v848 = vsub.s32 %v768, %v847
        %v849 = vrot.slane %v750, %v848
        %v850 = vlaneseq
        %v851 = vshrl.u32 %v850, 7
        %v852 = vsub.s32 %v768, %v851
        %v853 = vrot.slane %v753, %v852
        %v854 = vsel %vm485, %v829, %v825
        %v855 = vsel %vm487, %v833, %v854
        %v856 = vsel %vm489, %v837, %v855
        %v857 = vsel %vm491, %v841, %v856
        %v858 = vsel %vm493, %v845, %v857
        %v859 = vsel %vm495, %v849, %v858
        %v860 = vsel %vm497, %v853, %v859
        %v862 = vadd.f32 %v813, %v860
        %v864 = vcombine.high %v809, %v809
        %v866 = vunpack.c.l.s4 1966171168
        %v867 = vunpack.c.0.s8 %v866
        %v868 = vlaneseq
        %v869 = vshrl.u32 %v868, 7
        %v870 = vsub.s32 %v867, %v869
        %v871 = vrot.slane %v809, %v870
        %v873 = vunpack.c.l.s4 1966171168
        %v874 = vunpack.c.0.s8 %v873
        %v875 = vlaneseq
        %v876 = vshrl.u32 %v875, 7
        %v877 = vsub.s32 %v874, %v876
        %v878 = vrot.slane %v864, %v877
        %v879 = vcombine.high %v871, %v871
        %v880 = vcombine.high %v878, %v878
        %v882 = vunpack.c.l.s4 1966171168
        %v883 = vunpack.c.0.s8 %v882
        %v884 = vlaneseq
        %v885 = vshrl.u32 %v884, 7
        %v886 = vsub.s32 %v883, %v885
        %v887 = vrot.slane %v871, %v886
        %v889 = vunpack.c.l.s4 1966171168
        %v890 = vunpack.c.0.s8 %v889
        %v891 = vlaneseq
        %v892 = vshrl.u32 %v891, 7
        %v893 = vsub.s32 %v890, %v892
        %v894 = vrot.slane %v878, %v893
        %v896 = vunpack.c.l.s4 1966171168
        %v897 = vunpack.c.0.s8 %v896
        %v898 = vlaneseq
        %v899 = vshrl.u32 %v898, 7
        %v900 = vsub.s32 %v897, %v899
        %v901 = vrot.slane %v879, %v900
        %v903 = vunpack.c.l.s4 1966171168
        %v904 = vunpack.c.0.s8 %v903
        %v905 = vlaneseq
        %v906 = vshrl.u32 %v905, 7
        %v907 = vsub.s32 %v904, %v906
        %v908 = vrot.slane %v880, %v907
        %v909 = vcombine.high %v887, %v887
        %v910 = vcombine.high %v894, %v894
        %v911 = vcombine.high %v901, %v901
        %v912 = vcombine.high %v908, %v908
        %v922 = vcombine.high %v862, %v862
        %v924 = vunpack.c.l.s4 1966171168
        %v925 = vunpack.c.0.s8 %v924
        %v926 = vlaneseq
        %v927 = vshrl.u32 %v926, 7
        %v928 = vsub.s32 %v925, %v927
        %v929 = vrot.slane %v862, %v928
        %v931 = vunpack.c.l.s4 1966171168
        %v932 = vunpack.c.0.s8 %v931
        %v933 = vlaneseq
        %v934 = vshrl.u32 %v933, 7
        %v935 = vsub.s32 %v932, %v934
        %v936 = vrot.slane %v922, %v935
        %v937 = vcombine.high %v929, %v929
        %v938 = vcombine.high %v936, %v936
        %v940 = vunpack.c.l.s4 1966171168
        %v941 = vunpack.c.0.s8 %v940
        %v942 = vlaneseq
        %v943 = vshrl.u32 %v942, 7
        %v944 = vsub.s32 %v941, %v943
        %v945 = vrot.slane %v929, %v944
        %v947 = vunpack.c.l.s4 1966171168
        %v948 = vunpack.c.0.s8 %v947
        %v949 = vlaneseq
        %v950 = vshrl.u32 %v949, 7
        %v951 = vsub.s32 %v948, %v950
        %v952 = vrot.slane %v936, %v951
        %v954 = vunpack.c.l.s4 1966171168
        %v955 = vunpack.c.0.s8 %v954
        %v956 = vlaneseq
        %v957 = vshrl.u32 %v956, 7
        %v958 = vsub.s32 %v955, %v957
        %v959 = vrot.slane %v937, %v958
        %v961 = vunpack.c.l.s4 1966171168
        %v962 = vunpack.c.0.s8 %v961
        %v963 = vlaneseq
        %v964 = vshrl.u32 %v963, 7
        %v965 = vsub.s32 %v962, %v964
        %v966 = vrot.slane %v938, %v965
        %v967 = vcombine.high %v945, %v945
        %v968 = vcombine.high %v952, %v952
        %v969 = vcombine.high %v959, %v959
        %v970 = vcombine.high %v966, %v966
        %v971 = vlaneseq
        %v972 = vshrl.u32 %v971, 7
        %v973 = vsub.s32 0, %v972
        %v974 = vrot.slane %v945, %v973
        %v975 = vlaneseq
        %v976 = vshrl.u32 %v975, 7
        %v977 = vsub.s32 0, %v976
        %v978 = vrot.slane %v959, %v977
        %v979 = vlaneseq
        %v980 = vshrl.u32 %v979, 7
        %v981 = vsub.s32 0, %v980
        %v982 = vrot.slane %v967, %v981
        %v983 = vlaneseq
        %v984 = vshrl.u32 %v983, 7
        %v985 = vsub.s32 0, %v984
        %v986 = vrot.slane %v969, %v985
        %v987 = vlaneseq
        %v988 = vshrl.u32 %v987, 7
        %v989 = vsub.s32 0, %v988
        %v990 = vrot.slane %v952, %v989
        %v991 = vlaneseq
        %v992 = vshrl.u32 %v991, 7
        %v993 = vsub.s32 0, %v992
        %v994 = vrot.slane %v966, %v993
        %v995 = vlaneseq
        %v996 = vshrl.u32 %v995, 7
        %v997 = vsub.s32 0, %v996
        %v998 = vrot.slane %v968, %v997
        %v999 = vlaneseq
        %v1000 = vshrl.u32 %v999, 7
        %v1001 = vsub.s32 0, %v1000
        %v1002 = vrot.slane %v970, %v1001
        %vm1011 = vcmask 1040384
        %v1012 = vsel %vm1011, %v887, %v974
        %v1013 = vsel %vm1011, %v901, %v978
        %v1014 = vsel %vm1011, %v909, %v982
        %v1015 = vsel %vm1011, %v911, %v986
        %v1016 = vsel %vm1011, %v894, %v990
        %v1017 = vsel %vm1011, %v908, %v994
        %v1018 = vsel %vm1011, %v910, %v998
        %v1019 = vsel %vm1011, %v912, %v1002
        %vm1020 = vcmask 58368
        %1021 = vst.msk [vmem:[%s324] sm:$0x3] %vm1020, %v1012
        %1022 = vst.msk [vmem:[%s324 + $0x2] sm:$0x3] %vm1020, %v1013
        %1023 = vst.msk [vmem:[%s324 + $0x4] sm:$0x3] %vm1020, %v1014
        %1024 = vst.msk [vmem:[%s324 + $0x6] sm:$0x3] %vm1020, %v1015
        %1025 = vst.msk [vmem:[%s324 + $0x8] sm:$0x3] %vm1020, %v1016
        %1026 = vst.msk [vmem:[%s324 + $0xa] sm:$0x3] %vm1020, %v1017
        %1027 = vst.msk [vmem:[%s324 + $0xc] sm:$0x3] %vm1020, %v1018
        %1028 = vst.msk [vmem:[%s324 + $0xe] sm:$0x3] %vm1020, %v1019
        %s1029 = sand.u32 %s207, 1
        %s1030 = scalar_lea.sflag [#allocation3], %s1029
        %s1031 = sand.u32 %s207, 1
        %s1032 = smul.addr %s1031, 16
        %s1033 = scalar_lea.vmem [#allocation2], %s1032
        // Predicated region
        $region49: #{evaluation_predictor_forward.1} parent=47 // pred_check
          %p1034 = pneg %p217
        $region50: #{evaluation_predictor_forward.1} parent=47 // pred_check_branch
          %1036 = sbr.rel (%p1034) target = $region52
        $region51: #{evaluation_predictor_forward.1} parent=47 // pred_region
          %s1037 = smul.u32 8, %s26
          %s1039 = ssub.s32 256, 256
          %1040 = vsyncadd %s1030, %s1039
          %s1041 = smul.addr %s25, 8
          %s1042 = sadd.s32 %s1037, %s1041
          %s1043 = smul.addr %s1042, 32
          %s1044 = scalar_lea.hbm %s7, %s1043
          %s1045 = sshll.u32 %s1033, 4
          %s1046 = int_to_ptr.vmem [resolvable:$true] %s1045
          %1051 = dma.vmem_to_hbm [thread:$0]  %s1046, 256, %s1044, %s1030, 32, 32, 2
        $region52: #{evaluation_predictor_forward.1} parent=47 // pred_fallthru
          _
      $region48: #{evaluation_predictor_forward.1} parent=5 // pred_fallthru
        _
      %p1052 = scmp.le.s32.totalorder 2, %s16
      // Predicated region
      $region53: #{evaluation_predictor_forward.1} parent=5 // pred_check
        %p1053 = pneg %p1052
      $region54: #{evaluation_predictor_forward.1} parent=5 // pred_check_branch
        %1055 = sbr.rel (%p1053) target = $region56
      $region55: #{evaluation_predictor_forward.1} parent=5 // pred_region
        %s1056 = ssub.s32 %s16, 2
        // Predicated region
        $region57: #{evaluation_predictor_forward.1} parent=55 // pred_check
          %p1057 = pneg %p223
        $region58: #{evaluation_predictor_forward.1} parent=55 // pred_check_branch
          %1059 = sbr.rel (%p1057) target = $region60
        $region59: #{evaluation_predictor_forward.1} parent=55 // pred_region
          %s1060 = sand.u32 %s208, 1
          %s1061 = scalar_lea.sflag [#allocation3], %s1060
          %s1062 = sand.u32 %s208, 1
          %s1063 = smul.addr %s1062, 16
          %s1064 = scalar_lea.vmem [#allocation2], %s1063
          %1065 = dma.done %s1061, 256
        $region60: #{evaluation_predictor_forward.1} parent=55 // pred_fallthru
          _
      $region56: #{evaluation_predictor_forward.1} parent=5 // pred_fallthru
        _
    $region6: #{evaluation_predictor_forward.1} parent=1 // loop_footer
      %s20 = sadd.s32 1, %s16
    $region7: #{evaluation_predictor_forward.1} parent=1 // loop_footer_branch
      %15 = sbr.rel target = $region3
    $region8: #{evaluation_predictor_forward.1} parent=1 // loop_exit
      _
    %1066 = vsyncpa [#allocation3], 1
    %s1067 = scalar_lea.sflag [#allocation3], 1
    %1068 = vsyncpa %s1067, 1

</llo_original>
